<compile_context>
chip_gen: v7x
topology: tpu7x:2x2x1
jax: 0.10.0
libtpu: 0.0.40
codegen_flags: <defaults>
</compile_context>

<pallas_src>
import functools
import math

import numpy as np
import jax
import jax.numpy as jnp
from jax import lax
from jax.experimental import pallas as pl
from jax.experimental.pallas import tpu as pltpu


_RC = 64                       # rows per in-kernel chunk (fast path)
_MAX_OUT_LANES = 512           # widest output block (multiple of 128)
_VMEM_LIMIT = 32 * 1024 * 1024


def _pick_block_bytes():
    """Per-generation input-block byte budget (bigger on 128-MiB-VMEM parts)."""
    try:
        info = pltpu.get_tpu_info()
        vmem = getattr(info, "vmem_capacity_bytes", 0) or 0
        if vmem >= 96 * 1024 * 1024:          # v5e / v6e: 128 MiB VMEM
            return 6 * 1024 * 1024
    except Exception:
        pass
    return 4 * 1024 * 1024                    # v7x (64 MiB / TC) and default


_TARGET_BLOCK_BYTES = _pick_block_bytes()


def _round_up(x, m):
    return ((x + m - 1) // m) * m


# ---------------------------------------------------------------------------
# Fast kernel: lane-dense blocks, transpose + sublane-strided pool reduction.
# ---------------------------------------------------------------------------
def _maxout_kernel_fast(x_ref, o_ref, s_ref, *, pool):
    """x_ref: (tm, tn*pool)  o_ref: (tm, tn)  s_ref: (128*pool, rc) 32-bit."""
    tm = x_ref.shape[0]
    tn = o_ref.shape[1]                  # multiple of 128
    rc = s_ref.shape[1]                  # row chunk; wrapper guarantees tm % rc == 0
    acc_dtype = s_ref.dtype
    n_col = tn // 128
    n_row = tm // rc

    def row_body(i, carry):
        r0 = pl.multiple_of(i * rc, rc)
        for c in range(n_col):                        # static unroll (<= 4)
            base = c * pool * 128                     # input-lane offset of this column
            # 1) features -> sublanes: transpose each 128-lane input slab into scratch.
            for q in range(pool):                     # static unroll
                xq = x_ref[pl.ds(r0, rc), pl.ds(base + q * 128, 128)]
                s_ref[q * 128:(q + 1) * 128, :] = jnp.swapaxes(
                    xq.astype(acc_dtype), 0, 1)
            # 2) pool reduction via sublane-strided loads (supported stride axis).
            acc = s_ref[pl.ds(0, 128, stride=pool), :]
            for p in range(1, pool):
                acc = jnp.maximum(acc, s_ref[pl.ds(p, 128, stride=pool), :])
            # 3) rows back onto sublanes and a 128-lane (unmasked) store.
            o_ref[pl.ds(r0, rc), pl.ds(c * 128, 128)] = jnp.swapaxes(
                acc, 0, 1).astype(o_ref.dtype)
        return carry

    lax.fori_loop(0, n_row, row_body, 0)


# ---------------------------------------------------------------------------
# Safe fallback kernel: pool is the innermost (arbitrary) grid axis,
# elementwise max accumulation into a resident output block.
# ---------------------------------------------------------------------------
def _maxout_kernel_safe(x_ref, o_ref):
    """x_ref: (1, tm, tn) slice of (pool, rows, ow)  o_ref: (tm, tn) accumulator."""
    v = x_ref[0]

    @pl.when(pl.program_id(2) == 0)
    def _():
        o_ref[...] = v

    @pl.when(pl.program_id(2) > 0)
    def _():
        o_ref[...] = jnp.maximum(o_ref[...], v)


# ---------------------------------------------------------------------------
# Builders (cached so repeated calls reuse the same traced callables).
# ---------------------------------------------------------------------------
@functools.lru_cache(maxsize=None)
def _build_fast(rows, h, tm, tn, pool, dtype_name, acc_name, rc):
    dtype = np.dtype(dtype_name)
    acc = np.dtype(acc_name)
    grid = (pl.cdiv(rows, tm), pl.cdiv(h, tn * pool))
    return pl.pallas_call(
        functools.partial(_maxout_kernel_fast, pool=pool),
        out_shape=jax.ShapeDtypeStruct((rows, h // pool), dtype),
        grid_spec=pltpu.PrefetchScalarGridSpec(
            num_scalar_prefetch=0,
            grid=grid,
            in_specs=[pl.BlockSpec((tm, tn * pool), lambda i, j: (i, j))],
            out_specs=pl.BlockSpec((tm, tn), lambda i, j: (i, j)),
            scratch_shapes=[pltpu.VMEM((128 * pool, rc), acc)],
        ),
        compiler_params=pltpu.CompilerParams(
            dimension_semantics=("parallel", "parallel"),
            vmem_limit_bytes=_VMEM_LIMIT,
        ),
    )


@functools.lru_cache(maxsize=None)
def _build_safe(rows, ow, pool, tm, tn, dtype_name):
    dtype = np.dtype(dtype_name)
    grid = (pl.cdiv(rows, tm), pl.cdiv(ow, tn), pool)
    return pl.pallas_call(
        _maxout_kernel_safe,
        out_shape=jax.ShapeDtypeStruct((rows, ow), dtype),
        grid_spec=pltpu.PrefetchScalarGridSpec(
            num_scalar_prefetch=0,
            grid=grid,
            in_specs=[pl.BlockSpec((1, tm, tn), lambda i, j, p: (p, i, j))],
            out_specs=pl.BlockSpec((tm, tn), lambda i, j, p: (i, j)),
            scratch_shapes=[],
        ),
        compiler_params=pltpu.CompilerParams(
            dimension_semantics=("parallel", "parallel", "arbitrary"),
            vmem_limit_bytes=_VMEM_LIMIT,
        ),
    )


@functools.lru_cache(maxsize=None)
def _fast_path_compiles(rows, h, tm, tn, pool, dtype_name, acc_name, rc):
    """One-time cached AOT probe (lower + Mosaic compile); never runs eagerly."""
    try:
        call = _build_fast(rows, h, tm, tn, pool, dtype_name, acc_name, rc)
        jax.jit(call).lower(
            jax.ShapeDtypeStruct((rows, h), np.dtype(dtype_name))).compile()
        return True
    except Exception:
        return False


# ---------------------------------------------------------------------------
# Wrapper.
# ---------------------------------------------------------------------------
def _fold_factor(rows, ow):
    """Divisor g of `rows` so the folded output width ow*g is >= 128 lanes
    (and ideally a multiple of 128).  Folding is a free row-major reshape;
    since h % pool == 0, groups never straddle a folded row."""
    if ow >= 128 or rows <= 1:
        return 1
    divs = set()
    for d in range(1, int(math.isqrt(rows)) + 1):
        if rows % d == 0:
            divs.add(d)
            divs.add(rows // d)
    cands = sorted(g for g in divs if ow * g >= 128)
    if not cands:
        return rows                       # fold everything; width stays < 128
    exact = [g for g in cands if (ow * g) % 128 == 0]
    return exact[0] if exact else cands[0]


def _acc_dtype(dtype):
    if jnp.issubdtype(dtype, jnp.floating):
        return np.dtype("float32")
    if jnp.issubdtype(dtype, jnp.signedinteger):
        return np.dtype("int32")
    if jnp.issubdtype(dtype, jnp.unsignedinteger):
        return np.dtype("uint32")
    return None


def maxout(x: jax.Array, pool_size: int) -> jax.Array:
    """Pallas TPU implementation of Maxout over the last dimension."""
    if pool_size <= 0:
        raise ValueError("pool_size must be positive")
    *lead, h = x.shape
    if h % pool_size != 0:
        raise ValueError("last dim must be divisible by pool_size")
    ow = h // pool_size
    if pool_size == 1:
        return x
    if x.size == 0:
        return jnp.zeros((*lead, ow), x.dtype)

    rows = math.prod(lead) if lead else 1

    # Generalized row folding keeps output blocks 128-lane dense for narrow h.
    g = _fold_factor(rows, ow)
    rows2, ow2, h2 = rows // g, ow * g, h * g
    x2 = x.reshape(rows2, h2)

    itemsize = x.dtype.itemsize
    dtype_name = x.dtype.name

    # Feature (output-lane) tile: as wide as possible in multiples of 128 lanes.
    if ow2 >= 128:
        tn = min((ow2 // 128) * 128, _MAX_OUT_LANES)
        while tn > 128 and _RC * tn * pool_size * itemsize > _TARGET_BLOCK_BYTES:
            tn -= 128
    else:
        tn = ow2
    tf = tn * pool_size
    assert tf % pool_size == 0            # groups never straddle a feature block

    # Row tile from the per-step byte budget; keep >= 2 grid steps when possible
    # (v7x megacore) and balance row blocks so no block is mostly padding.
    bytes_per_row = max(tf * itemsize, 1)
    tm_cap = max(_RC, (_TARGET_BLOCK_BYTES // bytes_per_row) // _RC * _RC)
    if rows2 <= _RC:
        tm = rows2
    else:
        tm = min(tm_cap, _round_up(rows2, _RC))
        if pl.cdiv(rows2, tm) * pl.cdiv(ow2, tn) < 2:
            tm = max(_RC, _round_up((rows2 + 1) // 2, _RC))
        n_i = pl.cdiv(rows2, tm)
        tm = min(tm, max(_RC, _round_up(-(-rows2 // n_i), _RC)))
    rc = min(_RC, tm)
    assert tm % rc == 0

    acc = _acc_dtype(x.dtype)
    use_fast = (
        acc is not None
        and pool_size <= 128
        and 128 % pool_size == 0
        and ow2 >= 128
        and tn % 128 == 0
        and _fast_path_compiles(rows2, h2, tm, tn, pool_size, dtype_name,
                                acc.name, rc)
    )

    if use_fast:
        out2 = _build_fast(rows2, h2, tm, tn, pool_size, dtype_name,
                           acc.name, rc)(x2)
    else:
        # Guaranteed-lowering fallback: XLA puts the pool axis in front (one
        # transpose pass), then the kernel is a pure elementwise max accumulation.
        x3 = jnp.moveaxis(x2.reshape(rows2, ow2, pool_size), -1, 0)
        out2 = _build_safe(rows2, ow2, pool_size, tm, tn, dtype_name)(x3)

    return out2.reshape(*lead, ow)


def _maxout_ref(x: jax.Array, pool_size: int) -> jax.Array:
    *lead, h = x.shape
    return jnp.max(x.reshape(*lead, h // pool_size, pool_size), axis=-1)


if __name__ == "__main__":
    # Case 1: small shape matching the module's forward (batch, seq, hidden).
    x1 = jax.random.normal(jax.random.PRNGKey(0), (2, 8, 32), dtype=jnp.float32)
    o1 = jax.block_until_ready(maxout(x1, 4))
    r1 = _maxout_ref(x1, 4)
    assert o1.shape == r1.shape and o1.dtype == x1.dtype
    assert jnp.array_equal(o1, r1), "mismatch vs reference (small case)"

    # Case 2: multi-step 2-D grid with a ragged feature edge (f32 fast path).
    x2 = jax.random.normal(jax.random.PRNGKey(1), (8, 256, 1152),
                           dtype=jnp.float32)
    assert jnp.array_equal(jax.block_until_ready(maxout(x2, 4)),
                           _maxout_ref(x2, 4)), "mismatch vs reference (grid case)"

    # Case 3: bf16 (dtype-general path; exact max through a 32-bit scratch).
    x3 = jax.random.normal(jax.random.PRNGKey(2), (4, 128, 1024),
                           dtype=jnp.bfloat16)
    assert jnp.array_equal(jax.block_until_ready(maxout(x3, 8)),
                           _maxout_ref(x3, 8)), "mismatch vs reference (bf16 case)"

    print("KERNEL_OK")
</pallas_src>

<mosaic_0001>
module attributes {stable_mosaic.version = 11 : i64} {
  func.func @_maxout_kernel_safe(%arg0: i32, %arg1: i32, %arg2: i32, %arg3: memref<1x1x128xf32, #tpu.memory_space<vmem>>, %arg4: memref<1x128xf32, #tpu.memory_space<vmem>>) attributes {dimension_semantics = [#tpu.dimension_semantics<parallel>, #tpu.dimension_semantics<parallel>, #tpu.dimension_semantics<arbitrary>], iteration_bounds = array<i64: 1, 1, 4>, scalar_prefetch = 0 : i64, scratch_operands = 0 : i64, tpu.core_type = #tpu.core_type<tc>, window_params = [{transform_indices = @transform_0, window_bounds = array<i64: 1, 1, 128>}, {transform_indices = @transform_1, window_bounds = array<i64: 1, 128>}]} {
    %c0 = arith.constant 0 : index
    %c0_0 = arith.constant 0 : index
    %c0_1 = arith.constant 0 : index
    %0 = vector.load %arg3[%c0, %c0_0, %c0_1] : memref<1x1x128xf32, #tpu.memory_space<vmem>>, vector<1x1x128xf32>
    %1 = vector.shape_cast %0 : vector<1x1x128xf32> to vector<1x128xf32>
    %c0_i32 = arith.constant 0 : i32
    %2 = arith.cmpi eq, %arg2, %c0_i32 : i32
    %3 = arith.extui %2 : i1 to i32
    %c0_i32_2 = arith.constant 0 : i32
    %4 = arith.cmpi ne, %3, %c0_i32_2 : i32
    scf.if %4 {
      %c0_5 = arith.constant 0 : index
      %c0_6 = arith.constant 0 : index
      %8 = vector.load %arg4[%c0_5, %c0_6] : memref<1x128xf32, #tpu.memory_space<vmem>>, vector<1x128xf32>
      tpu.vector_store %arg4[%c0_5, %c0_6], %1 {strides = array<i32>} : memref<1x128xf32, #tpu.memory_space<vmem>>, vector<1x128xf32>,
    } else {
    }
    %c0_i32_3 = arith.constant 0 : i32
    %5 = arith.cmpi sgt, %arg2, %c0_i32_3 : i32
    %6 = arith.extui %5 : i1 to i32
    %c0_i32_4 = arith.constant 0 : i32
    %7 = arith.cmpi ne, %6, %c0_i32_4 : i32
    scf.if %7 {
      %c0_5 = arith.constant 0 : index
      %c0_6 = arith.constant 0 : index
      %8 = vector.load %arg4[%c0_5, %c0_6] : memref<1x128xf32, #tpu.memory_space<vmem>>, vector<1x128xf32>
      %9 = arith.maximumf %8, %1 : vector<1x128xf32>
      %c0_7 = arith.constant 0 : index
      %c0_8 = arith.constant 0 : index
      %10 = vector.load %arg4[%c0_7, %c0_8] : memref<1x128xf32, #tpu.memory_space<vmem>>, vector<1x128xf32>
      tpu.vector_store %arg4[%c0_7, %c0_8], %9 {strides = array<i32>} : memref<1x128xf32, #tpu.memory_space<vmem>>, vector<1x128xf32>,
    } else {
    }
    return
  }
  func.func @transform_0(%arg0: i32, %arg1: i32, %arg2: i32) -> (i32, i32, i32) {
    %c0_i32 = arith.constant 0 : i32
    return %arg2, %arg0, %arg1 : i32, i32, i32
  }
  func.func @transform_1(%arg0: i32, %arg1: i32, %arg2: i32) -> (i32, i32) {
    %c0_i32 = arith.constant 0 : i32
    return %arg0, %arg1 : i32, i32
  }
}

</mosaic_0001>

<llo_original>
// kernel: tpu_custom_call.1
$region0: #{tpu_custom_call.1}
  #allocation0 [shape = 'u32[]', space=smem, size = 0x4, offset = 0x4, fixed_abs, tag = 'smem constant byte address 0x4 - core index']
  #allocation1 [shape = 'u32[144,128]{1,0:T(1,128)}', space=vmem, size = 0x12000, scoped, tag = 'internal scratch']
  %s0 = inlined_call_operand.hbm [shape: f32[4,1,128], index: 0, kind: input, shape index: {}]
  %s1 = inlined_call_operand.hbm [shape: f32[1,128], index: 1, kind: output, shape index: {}]
  %s2 = sld [smem:[#allocation0]]
  $region49: #{tpu_custom_call.1} parent=0
    _
  %s4 = ssub.s32 1, %s2
  %s5 = scalar_select 0, %s4, %s2
  $region1: #{tpu_custom_call.1} parent=0
    #allocation2 [shape = 'u8[1024]{0}', space=vmem, size = 0x400, scoped, tag = 'input window, operand 0']
    #allocation3 [shape = 's32[2]{0}', space=sflag, size = 0x8, scoped, tag = 'scoped memory for tpu_custom_call.1']
    #allocation4 [shape = 's32[2]{0}', space=sflag, size = 0x8, scoped, tag = 'scoped memory for tpu_custom_call.1']
    #allocation5 [shape = 'u8[512]{0}', space=vmem, size = 0x400, scoped, tag = 'output window, operand 0, single buffered']
    %6 = vsyncpa [#allocation3], 0
    %s7 = scalar_lea.sflag [#allocation3], 1
    %8 = vsyncpa %s7, 0
    %9 = vsyncpa [#allocation4], 0
    loop: start=0, step=1, limit=6
    $region2: #{tpu_custom_call.1} parent=1 // loop_pre_header
      _
    $region3: #{tpu_custom_call.1} parent=1 // loop_header
      %s11 = sphi 0, %s15
      %p12 = scmp.ge.s32.totalorder %s11, 6
      %s18 = sphi 0, %s37
      %s19 = sphi 0, %s33
      %s20 = sphi 0, %s29
      %s21 = sphi 0, %s18
      %s22 = sphi 0, %s19
      %s23 = sphi 0, %s20
      %s24 = sphi 0, %s21
      %s25 = sphi 0, %s22
      %s26 = sphi 0, %s23
      %s44 = sphi 0, %s46
      %s47 = sphi 0, %s44
      %s48 = sphi 0, %s47
      %s64 = sphi 0, %s48
      %s72 = sphi 0, %s74
      %s75 = sphi 0, %s72
      %s76 = sphi 0, %s75
      %s92 = sphi 0, %s76
    $region4: #{tpu_custom_call.1} parent=1 // loop_header_branch
      %14 = sbr.rel (%p12) target = $region8
    $region5: #{tpu_custom_call.1} parent=1 // loop_body
      %s16 = ssub.s32 %s11, 1
      %s17 = ssub.s32 %s11, 2
      %s27 = sadd.s32 1, %s20
      %p28 = scmp.ge.s32.totalorder %s27, 4
      %s29 = scalar_select %p28, 0, %s27
      %s30 = sadd.s32 1, %s19
      %s31 = scalar_select %p28, %s30, %s19
      %p32 = scmp.ge.s32.totalorder %s31, 1
      %s33 = scalar_select %p32, 0, %s31
      %s34 = sadd.s32 1, %s18
      %s35 = scalar_select %p32, %s34, %s18
      %p36 = scmp.ge.s32.totalorder %s35, 1
      %s37 = scalar_select %p36, 0, %s35
      %s38 = ssub.s32 %s20, %s29
      %s39 = ssub.s32 %s18, %s37
      %s40 = sor.u32 %s38, %s39
      %s41 = ssub.s32 %s19, %s33
      %s42 = sor.u32 %s40, %s41
      %p43 = scmp.eq.s32.totalorder %s42, 0
      %s45 = sadd.s32 %s44, 1
      %s46 = scalar_select %p43, %s44, %s45
      %p49 = pneg %p43
      %p50 = scmp.eq.s32.totalorder %s11, 3
      %p51 = por %p49, %p50
      %p52 = scmp.ne.s32.totalorder %s44, %s47
      %p53 = scmp.eq.s32.totalorder %s11, 0
      %p54 = por %p52, %p53
      %p55 = scmp.ne.s32.totalorder %s44, %s47
      %p56 = scmp.eq.s32.totalorder %s16, 3
      %p57 = por %p55, %p56
      %p58 = scmp.ne.s32.totalorder %s47, %s48
      %p59 = scmp.eq.s32.totalorder %s16, 0
      %p60 = por %p58, %p59
      %p61 = scmp.ne.s32.totalorder %s47, %s48
      %p62 = scmp.eq.s32.totalorder %s17, 3
      %p63 = por %p61, %p62
      %p65 = scmp.ne.s32.totalorder %s48, %s64
      %p66 = scmp.eq.s32.totalorder %s17, 0
      %p67 = por %p65, %p66
      %s68 = ssub.s32 %s18, %s37
      %s69 = ssub.s32 %s19, %s33
      %s70 = sor.u32 %s68, %s69
      %p71 = scmp.eq.s32.totalorder %s70, 0
      %s73 = sadd.s32 %s72, 1
      %s74 = scalar_select %p71, %s72, %s73
      %p77 = pneg %p71
      %p78 = scmp.eq.s32.totalorder %s11, 3
      %p79 = por %p77, %p78
      %p80 = scmp.ne.s32.totalorder %s72, %s75
      %p81 = scmp.eq.s32.totalorder %s11, 0
      %p82 = por %p80, %p81
      %p83 = scmp.ne.s32.totalorder %s72, %s75
      %p84 = scmp.eq.s32.totalorder %s16, 3
      %p85 = por %p83, %p84
      %p86 = scmp.ne.s32.totalorder %s75, %s76
      %p87 = scmp.eq.s32.totalorder %s16, 0
      %p88 = por %p86, %p87
      %p89 = scmp.ne.s32.totalorder %s75, %s76
      %p90 = scmp.eq.s32.totalorder %s17, 3
      %p91 = por %p89, %p90
      %p93 = scmp.ne.s32.totalorder %s76, %s92
      %p94 = scmp.eq.s32.totalorder %s17, 0
      %p95 = por %p93, %p94
      %p96 = scmp.le.s32.totalorder 1, %s11
      %p97 = scmp.lt.s32.totalorder %s11, 5
      %p98 = pnand %p96, %p97
      %p99 = pneg %p98
      // Predicated region
      $region9: #{tpu_custom_call.1} parent=5 // pred_check
        _
      $region10: #{tpu_custom_call.1} parent=5 // pred_check_branch
        %101 = sbr.rel (%p98) target = $region12
      $region11: #{tpu_custom_call.1} parent=5 // pred_region
        %s102 = ssub.s32 %s11, 1
      $region12: #{tpu_custom_call.1} parent=5 // pred_fallthru
        _
      %p103 = scmp.lt.s32.totalorder %s11, 4
      // Predicated region
      $region13: #{tpu_custom_call.1} parent=5 // pred_check
        %p104 = pneg %p103
      $region14: #{tpu_custom_call.1} parent=5 // pred_check_branch
        %106 = sbr.rel (%p104) target = $region16
      $region15: #{tpu_custom_call.1} parent=5 // pred_region
        // Predicated region
        $region17: #{tpu_custom_call.1} parent=15 // pred_check
          %p107 = pneg %p54
        $region18: #{tpu_custom_call.1} parent=15 // pred_check_branch
          %109 = sbr.rel (%p107) target = $region20
        $region19: #{tpu_custom_call.1} parent=15 // pred_region
          %s110 = sand.u32 %s44, 1
          %s111 = scalar_lea.sflag [#allocation3], %s110
          %s112 = sand.u32 %s44, 1
          %s113 = scalar_lea.vmem [#allocation2], %s112
          %s115 = ssub.s32 16, 16
          %116 = vsyncadd %s111, %s115
          %s117 = sadd.s32 %s19, %s18
          %s118 = sadd.s32 %s117, %s20
          %s119 = smul.addr %s118, 16
          %s120 = scalar_lea.hbm %s0, %s119
          %s122 = sshll.u32 %s113, 4
          %s123 = int_to_ptr.vmem [resolvable:$true] %s122
          %125 = dma.hbm_to_vmem [thread:$0]  %s120, 16, %s123, %s111
        $region20: #{tpu_custom_call.1} parent=15 // pred_fallthru
          _
      $region16: #{tpu_custom_call.1} parent=5 // pred_fallthru
        _
      %p126 = scmp.le.s32.totalorder 1, %s11
      %p127 = scmp.lt.s32.totalorder %s11, 5
      %p128 = pnand %p126, %p127
      %p129 = pneg %p128
      // Predicated region
      $region21: #{tpu_custom_call.1} parent=5 // pred_check
        _
      $region22: #{tpu_custom_call.1} parent=5 // pred_check_branch
        %131 = sbr.rel (%p128) target = $region24
      $region23: #{tpu_custom_call.1} parent=5 // pred_region
        %s132 = ssub.s32 %s11, 1
        %s133 = sand.u32 %s47, 1
        %s134 = scalar_lea.sflag [#allocation3], %s133
        %s135 = sand.u32 %s47, 1
        %s136 = scalar_lea.vmem [#allocation2], %s135
        // Predicated region
        $region25: #{tpu_custom_call.1} parent=23 // pred_check
          %p137 = pneg %p60
        $region26: #{tpu_custom_call.1} parent=23 // pred_check_branch
          %139 = sbr.rel (%p137) target = $region28
        $region27: #{tpu_custom_call.1} parent=23 // pred_region
          %140 = dma.done %s134, 16
        $region28: #{tpu_custom_call.1} parent=23 // pred_fallthru
          _
        %s141 = sand.u32 %s47, 1
        %s142 = scalar_lea.sflag [#allocation3], %s141
        %s143 = sand.u32 %s47, 1
        %s144 = scalar_lea.vmem [#allocation2], %s143
        %p145 = pneg %p60
        %p146 = pneg %p57
        %p147 = pneg %p88
        %p148 = pneg %p85
        %v149 = vld [vmem:[%s136] sm:$0x1]
        %p150 = scmp.eq.s32.totalorder %s23, 0
        // Predicated region
        $region29: #{tpu_custom_call.1} parent=23 // pred_check
          %p151 = pneg %p150
        $region30: #{tpu_custom_call.1} parent=23 // pred_check_branch
          %153 = sbr.rel (%p151) target = $region32
        $region31: #{tpu_custom_call.1} parent=23 // pred_region
          %154 = vst [vmem:[#allocation5] sm:$0x1] %v149
        $region32: #{tpu_custom_call.1} parent=23 // pred_fallthru
          _
        %p155 = scmp.gt.s32.totalorder %s23, 0
        // Predicated region
        $region33: #{tpu_custom_call.1} parent=23 // pred_check
          %p156 = pneg %p155
        $region34: #{tpu_custom_call.1} parent=23 // pred_check_branch
          %158 = sbr.rel (%p156) target = $region36
        $region35: #{tpu_custom_call.1} parent=23 // pred_region
          %v159 = vld [vmem:[#allocation5] sm:$0x1]
          %v160 = vmax.f32 %v159, %v149
          %161 = vst [vmem:[#allocation5] sm:$0x1] %v160
        $region36: #{tpu_custom_call.1} parent=23 // pred_fallthru
          _
        // Predicated region
        $region37: #{tpu_custom_call.1} parent=23 // pred_check
          %p162 = pneg %p85
        $region38: #{tpu_custom_call.1} parent=23 // pred_check_branch
          %164 = sbr.rel (%p162) target = $region40
        $region39: #{tpu_custom_call.1} parent=23 // pred_region
          %s166 = ssub.s32 16, 16
          %167 = vsyncadd [#allocation4], %s166
          %s168 = sadd.s32 %s22, %s21
          %s169 = smul.addr %s168, 16
          %s170 = scalar_lea.hbm %s1, %s169
          %s172 = sshll.u32 [#allocation5], 4
          %s173 = int_to_ptr.vmem [resolvable:$true] %s172
          %175 = dma.vmem_to_hbm [thread:$0]  %s173, 16, %s170, [#allocation4]
        $region40: #{tpu_custom_call.1} parent=23 // pred_fallthru
          _
        // Predicated region
        $region41: #{tpu_custom_call.1} parent=23 // pred_check
          %p176 = pneg %p85
        $region42: #{tpu_custom_call.1} parent=23 // pred_check_branch
          %178 = sbr.rel (%p176) target = $region44
        $region43: #{tpu_custom_call.1} parent=23 // pred_region
          %179 = dma.done [#allocation4], 16
        $region44: #{tpu_custom_call.1} parent=23 // pred_fallthru
          _
      $region24: #{tpu_custom_call.1} parent=5 // pred_fallthru
        _
      %p180 = scmp.le.s32.totalorder 2, %s11
      // Predicated region
      $region45: #{tpu_custom_call.1} parent=5 // pred_check
        %p181 = pneg %p180
      $region46: #{tpu_custom_call.1} parent=5 // pred_check_branch
        %183 = sbr.rel (%p181) target = $region48
      $region47: #{tpu_custom_call.1} parent=5 // pred_region
        %s184 = ssub.s32 %s11, 2
      $region48: #{tpu_custom_call.1} parent=5 // pred_fallthru
        _
    $region6: #{tpu_custom_call.1} parent=1 // loop_footer
      %s15 = sadd.s32 1, %s11
    $region7: #{tpu_custom_call.1} parent=1 // loop_footer_branch
      %10 = sbr.rel target = $region3
    $region8: #{tpu_custom_call.1} parent=1 // loop_exit
      _
    %185 = vsyncpa [#allocation3], 1
    %s186 = scalar_lea.sflag [#allocation3], 1
    %187 = vsyncpa %s186, 1
    %188 = vsyncpa [#allocation4], 1
    %s189 = scalar_lea.sflag [#allocation4], 1
    %190 = vsyncpa %s189, 1

</llo_original>
